<compile_context>
chip_gen: v5e
topology: v5e:2x2
jax: 0.10.0
libtpu: 0.0.40
codegen_flags: <defaults>
</compile_context>

<pallas_src>
import functools

import jax
import jax.numpy as jnp
from jax.experimental import pallas as pl
from jax.experimental.pallas import tpu as pltpu

_LANE = 128
_SUBLANE = 8


def _round_up(x, m):
    return (x + m - 1) // m * m


def policy_net_kernel(x_ref, w1_ref, b1_ref, w2_ref, b2_ref, out_ref, *, use_bf16):
    # x: (tb, IN_PAD), w1: (IN_PAD, H_PAD), b1: (1, H_PAD)
    # w2: (H_PAD, A_PAD), b2: (1, A_PAD), out: (tb, A_PAD)
    x = x_ref[...]
    w1 = w1_ref[...]
    w2 = w2_ref[...]

    if use_bf16:  # bf16 MXU operands, f32 accumulation (v6e / v7x)
        x_mm, w1_mm = x.astype(jnp.bfloat16), w1.astype(jnp.bfloat16)
    else:
        x_mm, w1_mm = x, w1

    # fc1 + ReLU (elementwise kept in f32 on all chip generations)
    h = jnp.dot(x_mm, w1_mm, preferred_element_type=jnp.float32) + b1_ref[...]
    h = jnp.maximum(h, 0.0)

    if use_bf16:
        h_mm, w2_mm = h.astype(jnp.bfloat16), w2.astype(jnp.bfloat16)
    else:
        h_mm, w2_mm = h, w2

    # fc2 (padded action lanes carry a -1e30 bias -> exp underflows to 0)
    logits = jnp.dot(h_mm, w2_mm, preferred_element_type=jnp.float32) + b2_ref[...]

    # numerically stable softmax over the (lane-dense) action axis
    m = jnp.max(logits, axis=-1, keepdims=True)
    e = jnp.exp(logits - m)
    denom = jnp.sum(e, axis=-1, keepdims=True)
    out_ref[...] = (e * pl.reciprocal(denom, approx=True)).astype(out_ref.dtype)


def policy_network_forward(x, w1, b1, w2, b2, *, block_b=1024, use_bf16=False):
    """softmax(relu(x @ w1 + b1) @ w2 + b2, axis=1) via a single pallas_call.

    x : (B, n_states) f32
    w1: (n_states, hidden), b1: (hidden,) or (1, hidden)
    w2: (hidden, n_actions), b2: (n_actions,) or (1, n_actions)
    """
    B, n_states = x.shape
    hidden = w1.shape[1]
    n_actions = w2.shape[1]

    # Pad feature dims to vreg-friendly sizes.
    in_p = _round_up(n_states, _SUBLANE)   # 4  -> 8
    h_p = _round_up(hidden, _LANE)         # 32 -> 128
    a_p = _round_up(n_actions, _LANE)      # 2  -> 128 (lane-dense output)

    # Batch tile: sublane-aligned, capped at block_b; pad B up to a multiple.
    tb = max(_SUBLANE, min(block_b, _round_up(B, _SUBLANE)))
    tb = _round_up(tb, _SUBLANE)
    b_p = _round_up(B, tb)

    xp = jnp.pad(x.astype(jnp.float32), ((0, b_p - B), (0, in_p - n_states)))
    w1p = jnp.pad(w1.astype(jnp.float32),
                  ((0, in_p - n_states), (0, h_p - hidden)))
    b1p = jnp.pad(jnp.reshape(b1, (1, -1)).astype(jnp.float32),
                  ((0, 0), (0, h_p - hidden)))
    w2p = jnp.pad(w2.astype(jnp.float32),
                  ((0, h_p - hidden), (0, a_p - n_actions)))
    # Large negative bias on padded action lanes -> exp() == 0 in the softmax.
    b2p = jnp.pad(jnp.reshape(b2, (1, -1)).astype(jnp.float32),
                  ((0, 0), (0, a_p - n_actions)), constant_values=-1e30)

    kernel = functools.partial(policy_net_kernel, use_bf16=use_bf16)

    out = pl.pallas_call(
        kernel,
        out_shape=jax.ShapeDtypeStruct((b_p, a_p), jnp.float32),
        grid=(b_p // tb,),
        in_specs=[
            pl.BlockSpec((tb, in_p), lambda i: (i, 0)),   # x tile marches over batch
            pl.BlockSpec((in_p, h_p), lambda i: (0, 0)),  # weights stay VMEM-resident
            pl.BlockSpec((1, h_p), lambda i: (0, 0)),
            pl.BlockSpec((h_p, a_p), lambda i: (0, 0)),
            pl.BlockSpec((1, a_p), lambda i: (0, 0)),
        ],
        out_specs=pl.BlockSpec((tb, a_p), lambda i: (i, 0)),
        compiler_params=pltpu.CompilerParams(
            dimension_semantics=("parallel",)),   # shards tiles across TCs on v7x
    )(xp, w1p, b1p, w2p, b2p)

    # Strip batch/action padding outside the kernel (kernel store is lane-dense).
    return out[:B, :n_actions]


def init_params(key, n_states, n_actions, hidden_layers):
    # Deterministic init mimicking PyTorch nn.Linear default:
    # U(-1/sqrt(fan_in), 1/sqrt(fan_in)) for both weight and bias.
    k1, k2, k3, k4 = jax.random.split(key, 4)
    bound1 = 1.0 / jnp.sqrt(n_states)
    bound2 = 1.0 / jnp.sqrt(hidden_layers)
    w1 = jax.random.uniform(k1, (n_states, hidden_layers), jnp.float32,
                            minval=-bound1, maxval=bound1)
    b1 = jax.random.uniform(k2, (1, hidden_layers), jnp.float32,
                            minval=-bound1, maxval=bound1)
    w2 = jax.random.uniform(k3, (hidden_layers, n_actions), jnp.float32,
                            minval=-bound2, maxval=bound2)
    b2 = jax.random.uniform(k4, (1, n_actions), jnp.float32,
                            minval=-bound2, maxval=bound2)
    return w1, b1, w2, b2


if __name__ == "__main__":
    # CartPole-v0: n_states = 4, n_actions = 2; hidden = 32, batch = 2.
    n_states, n_actions, hidden_layers = 4, 2, 32
    batch = 2

    key = jax.random.PRNGKey(0)
    kx, kp = jax.random.split(key)
    x = jax.random.normal(kx, (batch, n_states), jnp.float32)
    w1, b1, w2, b2 = init_params(kp, n_states, n_actions, hidden_layers)

    # --- small-batch path (matches the PyTorch module usage) -------------
    probs = policy_network_forward(x, w1, b1, w2, b2)
    probs = jax.block_until_ready(probs)

    h_ref = jnp.maximum(x @ w1 + b1, 0.0)
    ref = jax.nn.softmax(h_ref @ w2 + b2, axis=1)
    assert probs.shape == (batch, n_actions)
    # approx reciprocal in the softmax -> ~1e-3 tolerance
    assert jnp.allclose(probs, ref, atol=2e-3, rtol=2e-3)
    assert jnp.allclose(jnp.sum(probs, axis=1), 1.0, atol=2e-3)

    # --- batched path exercising the grid + bf16 MXU inputs (v6e/v7x) ----
    xb = jax.random.normal(jax.random.PRNGKey(1), (512, n_states), jnp.float32)
    probs_b = policy_network_forward(xb, w1, b1, w2, b2,
                                     block_b=256, use_bf16=True)
    probs_b = jax.block_until_ready(probs_b)
    ref_b = jax.nn.softmax(jnp.maximum(xb @ w1 + b1, 0.0) @ w2 + b2, axis=1)
    assert probs_b.shape == (512, n_actions)
    assert jnp.allclose(probs_b, ref_b, atol=2e-2, rtol=2e-2)
    assert jnp.allclose(jnp.sum(probs_b, axis=1), 1.0, atol=2e-2)

    # TODO(synk): optim.Adam update and choose_action's numpy sampling are
    # training/host-side logic, not part of the forward pass; not kernelized.
    print("KERNEL_OK")
</pallas_src>

<mosaic_0001>
module attributes {stable_mosaic.version = 11 : i64} {
  func.func @policy_net_kernel(%arg0: i32, %arg1: memref<8x8xf32, #tpu.memory_space<vmem>>, %arg2: memref<8x128xf32, #tpu.memory_space<vmem>>, %arg3: memref<1x128xf32, #tpu.memory_space<vmem>>, %arg4: memref<128x128xf32, #tpu.memory_space<vmem>>, %arg5: memref<1x128xf32, #tpu.memory_space<vmem>>, %arg6: memref<8x128xf32, #tpu.memory_space<vmem>>) attributes {dimension_semantics = [#tpu.dimension_semantics<parallel>], iteration_bounds = array<i64: 1>, scalar_prefetch = 0 : i64, scratch_operands = 0 : i64, tpu.core_type = #tpu.core_type<tc>, window_params = [{transform_indices = @transform_0, window_bounds = array<i64: 8, 8>}, {pipeline_mode = #tpu.pipeline_mode<synchronous>, transform_indices = @transform_1, window_bounds = array<i64: 8, 128>}, {pipeline_mode = #tpu.pipeline_mode<synchronous>, transform_indices = @transform_2, window_bounds = array<i64: 1, 128>}, {pipeline_mode = #tpu.pipeline_mode<synchronous>, transform_indices = @transform_3, window_bounds = array<i64: 128, 128>}, {pipeline_mode = #tpu.pipeline_mode<synchronous>, transform_indices = @transform_4, window_bounds = array<i64: 1, 128>}, {transform_indices = @transform_5, window_bounds = array<i64: 8, 128>}]} {
    %c0 = arith.constant 0 : index
    %c0_0 = arith.constant 0 : index
    %0 = vector.load %arg1[%c0, %c0_0] : memref<8x8xf32, #tpu.memory_space<vmem>>, vector<8x8xf32>
    %c0_1 = arith.constant 0 : index
    %c0_2 = arith.constant 0 : index
    %1 = vector.load %arg2[%c0_1, %c0_2] : memref<8x128xf32, #tpu.memory_space<vmem>>, vector<8x128xf32>
    %c0_3 = arith.constant 0 : index
    %c0_4 = arith.constant 0 : index
    %2 = vector.load %arg4[%c0_3, %c0_4] : memref<128x128xf32, #tpu.memory_space<vmem>>, vector<128x128xf32>
    %cst = arith.constant dense<0.000000e+00> : vector<8x128xf32>
    %3 = tpu.matmul %0, %1, %cst {dimension_numbers = #tpu.dot_dimension_numbers<[1], [0], [0], [1], [0, 0, 1, 1], [], []>} : vector<8x8xf32>, vector<8x128xf32>, vector<8x128xf32> -> vector<8x128xf32>
    %c0_5 = arith.constant 0 : index
    %c0_6 = arith.constant 0 : index
    %4 = vector.load %arg3[%c0_5, %c0_6] : memref<1x128xf32, #tpu.memory_space<vmem>>, vector<1x128xf32>
    %5 = vector.broadcast %4 : vector<1x128xf32> to vector<8x128xf32>
    %6 = arith.addf %3, %5 : vector<8x128xf32>
    %cst_7 = arith.constant 0.000000e+00 : f32
    %7 = vector.broadcast %cst_7 : f32 to vector<8x128xf32>
    %8 = arith.maximumf %6, %7 : vector<8x128xf32>
    %cst_8 = arith.constant dense<0.000000e+00> : vector<8x128xf32>
    %9 = tpu.matmul %8, %2, %cst_8 {dimension_numbers = #tpu.dot_dimension_numbers<[1], [0], [0], [1], [0, 0, 1, 1], [], []>} : vector<8x128xf32>, vector<128x128xf32>, vector<8x128xf32> -> vector<8x128xf32>
    %c0_9 = arith.constant 0 : index
    %c0_10 = arith.constant 0 : index
    %10 = vector.load %arg5[%c0_9, %c0_10] : memref<1x128xf32, #tpu.memory_space<vmem>>, vector<1x128xf32>
    %11 = vector.broadcast %10 : vector<1x128xf32> to vector<8x128xf32>
    %12 = arith.addf %9, %11 : vector<8x128xf32>
    %cst_11 = arith.constant dense<0xFF800000> : vector<8xf32>
    %13 = vector.multi_reduction <maximumf>, %12, %cst_11 [1] : vector<8x128xf32> to vector<8xf32>
    %14 = vector.shape_cast %13 : vector<8xf32> to vector<8x1xf32>
    %15 = vector.broadcast %14 : vector<8x1xf32> to vector<8x128xf32>
    %16 = arith.subf %12, %15 : vector<8x128xf32>
    %17 = math.exp %16 : vector<8x128xf32>
    %cst_12 = arith.constant dense<0.000000e+00> : vector<8xf32>
    %18 = vector.multi_reduction <add>, %17, %cst_12 [1] : vector<8x128xf32> to vector<8xf32>
    %19 = vector.shape_cast %18 : vector<8xf32> to vector<8x1xf32>
    %20 = tpu.reciprocal %19 {approx = true} : vector<8x1xf32> -> vector<8x1xf32>
    %21 = vector.broadcast %20 : vector<8x1xf32> to vector<8x128xf32>
    %22 = arith.mulf %17, %21 : vector<8x128xf32>
    %c0_13 = arith.constant 0 : index
    %c0_14 = arith.constant 0 : index
    %23 = vector.load %arg6[%c0_13, %c0_14] : memref<8x128xf32, #tpu.memory_space<vmem>>, vector<8x128xf32>
    tpu.vector_store %arg6[%c0_13, %c0_14], %22 {strides = array<i32>} : memref<8x128xf32, #tpu.memory_space<vmem>>, vector<8x128xf32>,
    return
  }
  func.func @transform_0(%arg0: i32) -> (i32, i32) {
    %c0_i32 = arith.constant 0 : i32
    %c0_i32_0 = arith.constant 0 : i32
    return %arg0, %c0_i32 : i32, i32
  }
  func.func @transform_1(%arg0: i32) -> (i32, i32) {
    %c0_i32 = arith.constant 0 : i32
    %c0_i32_0 = arith.constant 0 : i32
    %c0_i32_1 = arith.constant 0 : i32
    return %c0_i32, %c0_i32_0 : i32, i32
  }
  func.func @transform_2(%arg0: i32) -> (i32, i32) {
    %c0_i32 = arith.constant 0 : i32
    %c0_i32_0 = arith.constant 0 : i32
    %c0_i32_1 = arith.constant 0 : i32
    return %c0_i32, %c0_i32_0 : i32, i32
  }
  func.func @transform_3(%arg0: i32) -> (i32, i32) {
    %c0_i32 = arith.constant 0 : i32
    %c0_i32_0 = arith.constant 0 : i32
    %c0_i32_1 = arith.constant 0 : i32
    return %c0_i32, %c0_i32_0 : i32, i32
  }
  func.func @transform_4(%arg0: i32) -> (i32, i32) {
    %c0_i32 = arith.constant 0 : i32
    %c0_i32_0 = arith.constant 0 : i32
    %c0_i32_1 = arith.constant 0 : i32
    return %c0_i32, %c0_i32_0 : i32, i32
  }
  func.func @transform_5(%arg0: i32) -> (i32, i32) {
    %c0_i32 = arith.constant 0 : i32
    %c0_i32_0 = arith.constant 0 : i32
    return %arg0, %c0_i32 : i32, i32
  }
}

</mosaic_0001>

<llo_original>
// kernel: tpu_custom_call.1
$region0: #{tpu_custom_call.1}
  #allocation0 [shape = 'u32[]', space=smem, size = 0x4, offset = 0x4, fixed_abs, tag = 'smem constant byte address 0x4 - core index']
  #allocation1 [shape = 'u32[72,128]{1,0:T(1,128)}', space=vmem, size = 0x9000, scoped, tag = 'internal scratch']
  %s0 = inlined_call_operand.hbm [shape: f32[8,8], index: 0, kind: input, shape index: {}]
  %s1 = inlined_call_operand.hbm [shape: f32[8,128], index: 1, kind: input, shape index: {}]
  %s2 = inlined_call_operand.vmem [shape: f32[1,128], index: 2, kind: input, shape index: {}]
  %s3 = inlined_call_operand.hbm [shape: f32[128,128], index: 3, kind: input, shape index: {}]
  %s4 = inlined_call_operand.vmem [shape: f32[1,128], index: 4, kind: input, shape index: {}]
  %s5 = inlined_call_operand.hbm [shape: f32[8,128], index: 5, kind: output, shape index: {}]
  %s6 = sld [smem:[#allocation0]]
  $region42: #{tpu_custom_call.1} parent=0
    _
  %s8 = ssub.s32 1, %s6
  %s9 = scalar_select 0, %s8, %s6
  $region1: #{tpu_custom_call.1} parent=0
    #allocation2 [shape = 'u8[4096]{0}', space=vmem, size = 0x1000, scoped, tag = 'input window, operand 0, single buffered']
    #allocation3 [shape = 's32[1]{0}', space=sflag, size = 0x4, scoped, tag = 'scoped memory for tpu_custom_call.1']
    #allocation4 [shape = 's32[1]{0}', space=sflag, size = 0x4, scoped, tag = 'scoped memory for tpu_custom_call.1']
    #allocation5 [shape = 'u8[4096]{0}', space=vmem, size = 0x1000, scoped, tag = 'input window, operand 1, single buffered']
    #allocation6 [shape = 's32[1]{0}', space=sflag, size = 0x4, scoped, tag = 'scoped memory for tpu_custom_call.1']
    #allocation7 [shape = 'u8[65536]{0}', space=vmem, size = 0x10000, scoped, tag = 'input window, operand 3, single buffered']
    #allocation8 [shape = 'u8[4096]{0}', space=vmem, size = 0x1000, scoped, tag = 'output window, operand 0, single buffered']
    %10 = vsyncpa [#allocation3], 0
    %11 = vsyncpa [#allocation6], 0
    %12 = vsyncpa [#allocation4], 0
    // Predicated region
    $region2: #{tpu_custom_call.1} parent=1 // pred_check
      _
    $region3: #{tpu_custom_call.1} parent=1 // pred_check_branch
      %14 = sbr.rel (0) target = $region5
    $region4: #{tpu_custom_call.1} parent=1 // pred_region
      %16 = vsyncadd [#allocation3], 0
      %s18 = sshll.u32 %s0, 4
      %s19 = int_to_ptr.hbm [resolvable:$true] %s18
      %s20 = sshll.u32 [#allocation2], 4
      %s21 = int_to_ptr.vmem [resolvable:$true] %s20
      %23 = dma.hbm_to_vmem [thread:$0]  %s19, 128, %s21, [#allocation3]
    $region5: #{tpu_custom_call.1} parent=1 // pred_fallthru
      _
    // Predicated region
    $region6: #{tpu_custom_call.1} parent=1 // pred_check
      _
    $region7: #{tpu_custom_call.1} parent=1 // pred_check_branch
      %25 = sbr.rel (0) target = $region9
    $region8: #{tpu_custom_call.1} parent=1 // pred_region
      %27 = vsyncadd [#allocation6], 0
      %s29 = sshll.u32 %s1, 4
      %s30 = int_to_ptr.hbm [resolvable:$true] %s29
      %s31 = sshll.u32 [#allocation5], 4
      %s32 = int_to_ptr.vmem [resolvable:$true] %s31
      %34 = dma.hbm_to_vmem [thread:$0]  %s30, 128, %s32, [#allocation6]
    $region9: #{tpu_custom_call.1} parent=1 // pred_fallthru
      _
    // Predicated region
    $region10: #{tpu_custom_call.1} parent=1 // pred_check
      _
    $region11: #{tpu_custom_call.1} parent=1 // pred_check_branch
      %36 = sbr.rel (0) target = $region13
    $region12: #{tpu_custom_call.1} parent=1 // pred_region
      _
    $region13: #{tpu_custom_call.1} parent=1 // pred_fallthru
      _
    // Predicated region
    $region14: #{tpu_custom_call.1} parent=1 // pred_check
      _
    $region15: #{tpu_custom_call.1} parent=1 // pred_check_branch
      %38 = sbr.rel (0) target = $region17
    $region16: #{tpu_custom_call.1} parent=1 // pred_region
      %40 = vsyncadd [#allocation6], 0
      %s41 = sshll.u32 %s3, 4
      %s42 = int_to_ptr.hbm [resolvable:$true] %s41
      %s43 = sshll.u32 [#allocation7], 4
      %s44 = int_to_ptr.vmem [resolvable:$true] %s43
      %49 = dma.hbm_to_vmem [thread:$0]  %s42, 2048, %s44, [#allocation6], 128, 128, 8
    $region17: #{tpu_custom_call.1} parent=1 // pred_fallthru
      _
    // Predicated region
    $region18: #{tpu_custom_call.1} parent=1 // pred_check
      _
    $region19: #{tpu_custom_call.1} parent=1 // pred_check_branch
      %51 = sbr.rel (0) target = $region21
    $region20: #{tpu_custom_call.1} parent=1 // pred_region
      _
    $region21: #{tpu_custom_call.1} parent=1 // pred_fallthru
      _
    // Predicated region
    $region22: #{tpu_custom_call.1} parent=1 // pred_check
      _
    $region23: #{tpu_custom_call.1} parent=1 // pred_check_branch
      %53 = sbr.rel (0) target = $region25
    $region24: #{tpu_custom_call.1} parent=1 // pred_region
      %55 = dma.done [#allocation3], 128
    $region25: #{tpu_custom_call.1} parent=1 // pred_fallthru
      _
    // Predicated region
    $region26: #{tpu_custom_call.1} parent=1 // pred_check
      _
    $region27: #{tpu_custom_call.1} parent=1 // pred_check_branch
      %57 = sbr.rel (0) target = $region29
    $region28: #{tpu_custom_call.1} parent=1 // pred_region
      %59 = dma.done [#allocation6], 128
    $region29: #{tpu_custom_call.1} parent=1 // pred_fallthru
      _
    // Predicated region
    $region30: #{tpu_custom_call.1} parent=1 // pred_check
      _
    $region31: #{tpu_custom_call.1} parent=1 // pred_check_branch
      %61 = sbr.rel (0) target = $region33
    $region32: #{tpu_custom_call.1} parent=1 // pred_region
      %63 = dma.done [#allocation6], 2048
    $region33: #{tpu_custom_call.1} parent=1 // pred_fallthru
      _
    %v64 = vld [vmem:[#allocation2] sm:$0xff]
    %v65 = vld [vmem:[#allocation5] sm:$0xff]
    %v66 = vld [vmem:[#allocation7] sm:$0xff]
    %v67 = vld [vmem:[#allocation7 + $0x8] sm:$0xff]
    %v68 = vld [vmem:[#allocation7 + $0x10] sm:$0xff]
    %v69 = vld [vmem:[#allocation7 + $0x18] sm:$0xff]
    %v70 = vld [vmem:[#allocation7 + $0x20] sm:$0xff]
    %v71 = vld [vmem:[#allocation7 + $0x28] sm:$0xff]
    %v72 = vld [vmem:[#allocation7 + $0x30] sm:$0xff]
    %v73 = vld [vmem:[#allocation7 + $0x38] sm:$0xff]
    %v74 = vld [vmem:[#allocation7 + $0x40] sm:$0xff]
    %v75 = vld [vmem:[#allocation7 + $0x48] sm:$0xff]
    %v76 = vld [vmem:[#allocation7 + $0x50] sm:$0xff]
    %v77 = vld [vmem:[#allocation7 + $0x58] sm:$0xff]
    %v78 = vld [vmem:[#allocation7 + $0x60] sm:$0xff]
    %v79 = vld [vmem:[#allocation7 + $0x68] sm:$0xff]
    %v80 = vld [vmem:[#allocation7 + $0x70] sm:$0xff]
    %v81 = vld [vmem:[#allocation7 + $0x78] sm:$0xff]
    %v82 = vld [vmem:[%s2] sm:$0x1]
    %v84 = vperm.slane %v82, 0
    %vm86 = vcmask 64512
    %v88 = vsel %vm86, %v64, 0
    %90 = vmatpush.msra.mxu0 0.0
    %91 = vmatpush.msra.mxu0 0.0
    %92 = vmatpush.msra.mxu0 0.0
    %93 = vmatpush.msra.mxu0 0.0
    %94 = vmatpush.msra.mxu0 0.0
    %95 = vmatpush.msra.mxu0 0.0
    %96 = vmatpush.msra.mxu0 0.0
    %97 = vmatpush.msra.mxu0 0.0
    %98 = vmatpush.msra.mxu0 0.0
    %99 = vmatpush.msra.mxu0 0.0
    %100 = vmatpush.msra.mxu0 0.0
    %101 = vmatpush.msra.mxu0 0.0
    %102 = vmatpush.msra.mxu0 0.0
    %103 = vmatpush.msra.mxu0 0.0
    %104 = vmatpush.msra.mxu0 0.0
    %105 = vmatpush.msra.mxu0 %v65
    %106 = vmatmul.f32.gmra.mxu0 %v88
    %v107 = vpop.f32.mrf.mxu0
    %v108 = vadd.f32 %v84, %v107
    %109 = vdwg.mxu0
    %v110 = vmax.f32 %v108, 0.0
    %v111 = vld [vmem:[%s4] sm:$0x1]
    %v113 = vperm.slane %v111, 0
    %115 = vmatpush.msra.mxu0 %v81
    %116 = vmatpush.msra.mxu0 %v80
    %117 = vmatpush.msra.mxu0 %v79
    %118 = vmatpush.msra.mxu0 %v78
    %119 = vmatpush.msra.mxu0 %v77
    %120 = vmatpush.msra.mxu0 %v76
    %121 = vmatpush.msra.mxu0 %v75
    %122 = vmatpush.msra.mxu0 %v74
    %123 = vmatpush.msra.mxu0 %v73
    %124 = vmatpush.msra.mxu0 %v72
    %125 = vmatpush.msra.mxu0 %v71
    %126 = vmatpush.msra.mxu0 %v70
    %127 = vmatpush.msra.mxu0 %v69
    %128 = vmatpush.msra.mxu0 %v68
    %129 = vmatpush.msra.mxu0 %v67
    %130 = vmatpush.msra.mxu0 %v66
    %131 = vmatmul.f32.gmra.mxu0 %v110
    %v132 = vpop.f32.mrf.mxu0
    %v133 = vadd.f32 %v113, %v132
    %134 = vdwg.mxu0
    %135 = vmax.xlane.f32.xlu0 %v133
    %v136 = vpop.xlane.xlu0 %135
    %v137 = vsub.f32 %v133, %v136
    %v138 = vmul.f32 %v137, 1.442695
    %v139 = vpow.pop %v138
    %140 = vadd.xlane.f32.xlu0 %v139
    %v141 = vpop.xlane.xlu0 %140
    %v142 = vrcp.pop %v141
    %v143 = vmul.f32 %v139, %v142
    %144 = vst [vmem:[#allocation8] sm:$0xff] %v143
    // Predicated region
    $region34: #{tpu_custom_call.1} parent=1 // pred_check
      _
    $region35: #{tpu_custom_call.1} parent=1 // pred_check_branch
      %146 = sbr.rel (0) target = $region37
    $region36: #{tpu_custom_call.1} parent=1 // pred_region
      %148 = vsyncadd [#allocation4], 0
      %s150 = sshll.u32 [#allocation8], 4
      %s151 = int_to_ptr.vmem [resolvable:$true] %s150
      %s152 = sshll.u32 %s5, 4
      %s153 = int_to_ptr.hbm [resolvable:$true] %s152
      %155 = dma.vmem_to_hbm [thread:$0]  %s151, 128, %s153, [#allocation4]
    $region37: #{tpu_custom_call.1} parent=1 // pred_fallthru
      _
    // Predicated region
    $region38: #{tpu_custom_call.1} parent=1 // pred_check
      _
    $region39: #{tpu_custom_call.1} parent=1 // pred_check_branch
      %157 = sbr.rel (0) target = $region41
    $region40: #{tpu_custom_call.1} parent=1 // pred_region
      %159 = dma.done [#allocation4], 128
    $region41: #{tpu_custom_call.1} parent=1 // pred_fallthru
      _
    %160 = vsyncpa [#allocation3], 1
    %161 = vsyncpa [#allocation6], 1
    %162 = vsyncpa [#allocation4], 1

</llo_original>
